<compile_context>
chip_gen: v5e
topology: v5e:2x2
jax: 0.10.0
libtpu: 0.0.40
codegen_flags: <defaults>
</compile_context>

<pallas_src>
import jax
import jax.numpy as jnp
from jax.experimental import pallas as pl
from jax.experimental.pallas import tpu as pltpu


def _relu_kernel(x_ref, o_ref):
    # Elementwise ReLU on the whole VMEM tile (pure VPU op, no XLU/EUP work).
    o_ref[...] = jnp.maximum(x_ref[...], jnp.zeros((), dtype=o_ref.dtype))


def _round_up(a: int, b: int) -> int:
    return ((a + b - 1) // b) * b


def relu_alpha_forward(
    x: jax.Array, alpha: float, *, min_pallas_bytes: int = 256 * 1024
) -> jax.Array:
    """Forward of ReLUAlpha. `alpha` only matters for backward; kept for parity."""
    del alpha  # forward is independent of alpha

    total = x.size
    if total == 0:
        return x

    itemsize = jnp.dtype(x.dtype).itemsize
    nbytes = total * itemsize

    # Tiny tensors (kernel launch overhead dominates) or totals that are not a
    # multiple of 128 lanes: the fused XLA elementwise op is the right tool.
    if nbytes < min_pallas_bytes or total % 128 != 0:
        return jnp.maximum(x, jnp.zeros((), dtype=x.dtype))

    # ---- lane-dense flat 2-D view: (rows, L), L a large multiple of 128 that
    # exactly divides `total` (no padding; the reshape is layout-free). ----
    m = total // 128
    g = next(d for d in (16, 8, 4, 2, 1) if m % d == 0)
    L = 128 * g                      # 128 .. 2048 lanes
    rows = total // L
    x2d = x.reshape(rows, L)

    # ---- tile-size choice ----
    # Sublane packing multiple is dtype dependent (f32: 8, bf16: 16, int8/fp8: 32).
    sub = {4: 8, 2: 16, 1: 32}.get(itemsize, 8)

    target_block_bytes = 4 * 1024 * 1024          # ~4 MiB per block
    tr = max(sub, (target_block_bytes // (L * itemsize)) // sub * sub)
    tr = min(tr, _round_up(rows, sub))
    if rows <= tr and rows >= 2 * sub:
        # Give the megacore/v7x "parallel" axis at least two blocks when there
        # is enough data to split.
        tr = _round_up(pl.cdiv(rows, 2), sub)

    grid_rows = pl.cdiv(rows, tr)                 # ragged last block is masked

    block_bytes = tr * L * itemsize
    # 1 input + 1 output, double buffered, plus headroom; stay within the
    # smallest physical VMEM (64 MiB on v7x).
    vmem_limit = min(64 * 1024 * 1024, max(32 * 1024 * 1024, 6 * block_bytes))

    out2d = pl.pallas_call(
        _relu_kernel,
        out_shape=jax.ShapeDtypeStruct((rows, L), x.dtype),
        grid_spec=pltpu.PrefetchScalarGridSpec(
            num_scalar_prefetch=0,
            grid=(grid_rows,),
            in_specs=[pl.BlockSpec((tr, L), lambda i: (i, 0))],
            out_specs=pl.BlockSpec((tr, L), lambda i: (i, 0)),
        ),
        compiler_params=pltpu.CompilerParams(
            dimension_semantics=("parallel",),
            vmem_limit_bytes=vmem_limit,
        ),
        cost_estimate=pl.CostEstimate(
            flops=total,
            transcendentals=0,
            bytes_accessed=2 * nbytes,
        ),
    )(x2d)

    return out2d.reshape(x.shape)


class ReLUAlpha:
    """JAX/Pallas counterpart of the PyTorch ReLUAlpha module (forward only)."""

    # TODO(synk): alpha-dependent backward (grad at x == 0) is not implemented;
    # forward output is identical to the PyTorch module.
    def __init__(self, alpha: float):
        self.alpha = alpha

    def __call__(self, x: jax.Array) -> jax.Array:
        return relu_alpha_forward(x, self.alpha)


if __name__ == "__main__":
    key = jax.random.PRNGKey(0)
    k1, k2 = jax.random.split(key)
    alpha = 0.5
    module = ReLUAlpha(alpha)

    # Canonical small NCHW input. Force it through the Pallas path so the
    # kernel itself is exercised (2048 elems -> single (8, 2048)-padded block).
    x_small = jax.random.normal(k1, (2, 4, 16, 16), dtype=jnp.float32)
    out_small = jax.block_until_ready(
        relu_alpha_forward(x_small, alpha, min_pallas_bytes=0)
    )
    ref_small = jnp.maximum(x_small, 0.0)
    assert out_small.shape == x_small.shape and out_small.dtype == x_small.dtype
    assert jnp.array_equal(out_small, ref_small), "mismatch vs reference (small)"

    # Default module path on the same input (tiny -> XLA fallback; still correct).
    out_mod = jax.block_until_ready(module(x_small))
    assert jnp.array_equal(out_mod, ref_small), "mismatch vs reference (fallback)"

    # Larger input to exercise the multi-block grid + ragged last row-block:
    # 4*8*56*56 = 100352 elems -> (49, 2048) view, two row-blocks.
    x_big = jax.random.normal(k2, (4, 8, 56, 56), dtype=jnp.float32)
    out_big = jax.block_until_ready(relu_alpha_forward(x_big, alpha))
    ref_big = jnp.maximum(x_big, 0.0)
    assert out_big.shape == x_big.shape and out_big.dtype == x_big.dtype
    assert jnp.array_equal(out_big, ref_big), "mismatch vs reference (big)"

    # bf16 path exercises the dtype-aware sublane multiple (16) and packing.
    x_bf16 = jax.random.normal(k2, (4, 8, 64, 64), dtype=jnp.bfloat16)
    out_bf16 = jax.block_until_ready(relu_alpha_forward(x_bf16, alpha))
    ref_bf16 = jnp.maximum(x_bf16, jnp.zeros((), jnp.bfloat16))
    assert jnp.array_equal(out_bf16, ref_bf16), "mismatch vs reference (bf16)"

    print("KERNEL_OK")
</pallas_src>

<mosaic_0001>
module attributes {stable_mosaic.version = 11 : i64} {
  func.func @_relu_kernel(%arg0: i32, %arg1: memref<8x2048xf32, #tpu.memory_space<vmem>>, %arg2: memref<8x2048xf32, #tpu.memory_space<vmem>>) attributes {dimension_semantics = [#tpu.dimension_semantics<parallel>], iteration_bounds = array<i64: 1>, scalar_prefetch = 0 : i64, scratch_operands = 0 : i64, tpu.core_type = #tpu.core_type<tc>, window_params = [{transform_indices = @transform_0, window_bounds = array<i64: 8, 2048>}, {transform_indices = @transform_1, window_bounds = array<i64: 8, 2048>}]} {
    %c0 = arith.constant 0 : index
    %c0_0 = arith.constant 0 : index
    %0 = vector.load %arg1[%c0, %c0_0] : memref<8x2048xf32, #tpu.memory_space<vmem>>, vector<8x2048xf32>
    %cst = arith.constant 0.000000e+00 : f32
    %1 = vector.broadcast %cst : f32 to vector<8x2048xf32>
    %2 = arith.maximumf %0, %1 : vector<8x2048xf32>
    %c0_1 = arith.constant 0 : index
    %c0_2 = arith.constant 0 : index
    %3 = vector.load %arg2[%c0_1, %c0_2] : memref<8x2048xf32, #tpu.memory_space<vmem>>, vector<8x2048xf32>
    tpu.vector_store %arg2[%c0_1, %c0_2], %2 {strides = array<i32>} : memref<8x2048xf32, #tpu.memory_space<vmem>>, vector<8x2048xf32>,
    return
  }
  func.func @transform_0(%arg0: i32) -> (i32, i32) {
    %c0_i32 = arith.constant 0 : i32
    %c0_i32_0 = arith.constant 0 : i32
    return %arg0, %c0_i32 : i32, i32
  }
  func.func @transform_1(%arg0: i32) -> (i32, i32) {
    %c0_i32 = arith.constant 0 : i32
    %c0_i32_0 = arith.constant 0 : i32
    return %arg0, %c0_i32 : i32, i32
  }
}

</mosaic_0001>

<llo_original>
// kernel: tpu_custom_call.1
$region0: #{tpu_custom_call.1}
  #allocation0 [shape = 'u32[]', space=smem, size = 0x4, offset = 0x4, fixed_abs, tag = 'smem constant byte address 0x4 - core index']
  #allocation1 [shape = 'u32[72,128]{1,0:T(1,128)}', space=vmem, size = 0x9000, scoped, tag = 'internal scratch']
  %s0 = inlined_call_operand.hbm [shape: f32[1,2048], index: 0, kind: input, shape index: {}]
  %s1 = inlined_call_operand.hbm [shape: f32[1,2048], index: 1, kind: output, shape index: {}]
  %s2 = sld [smem:[#allocation0]]
  $region18: #{tpu_custom_call.1} parent=0
    _
  %s4 = ssub.s32 1, %s2
  %s5 = scalar_select 0, %s4, %s2
  $region1: #{tpu_custom_call.1} parent=0
    #allocation2 [shape = 'u8[65536]{0}', space=vmem, size = 0x10000, scoped, tag = 'input window, operand 0, single buffered']
    #allocation3 [shape = 's32[1]{0}', space=sflag, size = 0x4, scoped, tag = 'scoped memory for tpu_custom_call.1']
    #allocation4 [shape = 's32[1]{0}', space=sflag, size = 0x4, scoped, tag = 'scoped memory for tpu_custom_call.1']
    #allocation5 [shape = 'u8[65536]{0}', space=vmem, size = 0x10000, scoped, tag = 'output window, operand 0, single buffered']
    %6 = vsyncpa [#allocation3], 0
    %7 = vsyncpa [#allocation4], 0
    // Predicated region
    $region2: #{tpu_custom_call.1} parent=1 // pred_check
      _
    $region3: #{tpu_custom_call.1} parent=1 // pred_check_branch
      %9 = sbr.rel (0) target = $region5
    $region4: #{tpu_custom_call.1} parent=1 // pred_region
      %11 = vsyncadd [#allocation3], 1792
      %s12 = sshll.u32 %s0, 4
      %s13 = int_to_ptr.hbm [resolvable:$true] %s12
      %s14 = sshll.u32 [#allocation2], 4
      %s15 = int_to_ptr.vmem [resolvable:$true] %s14
      %20 = dma.hbm_to_vmem [thread:$0]  %s13, 256, %s15, [#allocation3], 256, 256, 16
    $region5: #{tpu_custom_call.1} parent=1 // pred_fallthru
      _
    // Predicated region
    $region6: #{tpu_custom_call.1} parent=1 // pred_check
      _
    $region7: #{tpu_custom_call.1} parent=1 // pred_check_branch
      %22 = sbr.rel (0) target = $region9
    $region8: #{tpu_custom_call.1} parent=1 // pred_region
      %24 = dma.done [#allocation3], 2048
    $region9: #{tpu_custom_call.1} parent=1 // pred_fallthru
      _
    %v25 = vld [vmem:[#allocation2] sm:$0xff]
    %v26 = vld [vmem:[#allocation2 + $0x8] sm:$0xff]
    %v27 = vld [vmem:[#allocation2 + $0x10] sm:$0xff]
    %v28 = vld [vmem:[#allocation2 + $0x18] sm:$0xff]
    %v29 = vld [vmem:[#allocation2 + $0x20] sm:$0xff]
    %v30 = vld [vmem:[#allocation2 + $0x28] sm:$0xff]
    %v31 = vld [vmem:[#allocation2 + $0x30] sm:$0xff]
    %v32 = vld [vmem:[#allocation2 + $0x38] sm:$0xff]
    %v33 = vld [vmem:[#allocation2 + $0x40] sm:$0xff]
    %v34 = vld [vmem:[#allocation2 + $0x48] sm:$0xff]
    %v35 = vld [vmem:[#allocation2 + $0x50] sm:$0xff]
    %v36 = vld [vmem:[#allocation2 + $0x58] sm:$0xff]
    %v37 = vld [vmem:[#allocation2 + $0x60] sm:$0xff]
    %v38 = vld [vmem:[#allocation2 + $0x68] sm:$0xff]
    %v39 = vld [vmem:[#allocation2 + $0x70] sm:$0xff]
    %v40 = vld [vmem:[#allocation2 + $0x78] sm:$0xff]
    %v41 = vmax.f32 %v25, 0.0
    %v42 = vmax.f32 %v26, 0.0
    %v43 = vmax.f32 %v27, 0.0
    %v44 = vmax.f32 %v28, 0.0
    %v45 = vmax.f32 %v29, 0.0
    %v46 = vmax.f32 %v30, 0.0
    %v47 = vmax.f32 %v31, 0.0
    %v48 = vmax.f32 %v32, 0.0
    %v49 = vmax.f32 %v33, 0.0
    %v50 = vmax.f32 %v34, 0.0
    %v51 = vmax.f32 %v35, 0.0
    %v52 = vmax.f32 %v36, 0.0
    %v53 = vmax.f32 %v37, 0.0
    %v54 = vmax.f32 %v38, 0.0
    %v55 = vmax.f32 %v39, 0.0
    %v56 = vmax.f32 %v40, 0.0
    %57 = vst [vmem:[#allocation5] sm:$0xff] %v41
    %58 = vst [vmem:[#allocation5 + $0x8] sm:$0xff] %v42
    %59 = vst [vmem:[#allocation5 + $0x10] sm:$0xff] %v43
    %60 = vst [vmem:[#allocation5 + $0x18] sm:$0xff] %v44
    %61 = vst [vmem:[#allocation5 + $0x20] sm:$0xff] %v45
    %62 = vst [vmem:[#allocation5 + $0x28] sm:$0xff] %v46
    %63 = vst [vmem:[#allocation5 + $0x30] sm:$0xff] %v47
    %64 = vst [vmem:[#allocation5 + $0x38] sm:$0xff] %v48
    %65 = vst [vmem:[#allocation5 + $0x40] sm:$0xff] %v49
    %66 = vst [vmem:[#allocation5 + $0x48] sm:$0xff] %v50
    %67 = vst [vmem:[#allocation5 + $0x50] sm:$0xff] %v51
    %68 = vst [vmem:[#allocation5 + $0x58] sm:$0xff] %v52
    %69 = vst [vmem:[#allocation5 + $0x60] sm:$0xff] %v53
    %70 = vst [vmem:[#allocation5 + $0x68] sm:$0xff] %v54
    %71 = vst [vmem:[#allocation5 + $0x70] sm:$0xff] %v55
    %72 = vst [vmem:[#allocation5 + $0x78] sm:$0xff] %v56
    // Predicated region
    $region10: #{tpu_custom_call.1} parent=1 // pred_check
      _
    $region11: #{tpu_custom_call.1} parent=1 // pred_check_branch
      %74 = sbr.rel (0) target = $region13
    $region12: #{tpu_custom_call.1} parent=1 // pred_region
      %76 = vsyncadd [#allocation4], 1792
      %s77 = sshll.u32 [#allocation5], 4
      %s78 = int_to_ptr.vmem [resolvable:$true] %s77
      %s79 = sshll.u32 %s1, 4
      %s80 = int_to_ptr.hbm [resolvable:$true] %s79
      %85 = dma.vmem_to_hbm [thread:$0]  %s78, 256, %s80, [#allocation4], 256, 256, 16
    $region13: #{tpu_custom_call.1} parent=1 // pred_fallthru
      _
    // Predicated region
    $region14: #{tpu_custom_call.1} parent=1 // pred_check
      _
    $region15: #{tpu_custom_call.1} parent=1 // pred_check_branch
      %87 = sbr.rel (0) target = $region17
    $region16: #{tpu_custom_call.1} parent=1 // pred_region
      %89 = dma.done [#allocation4], 2048
    $region17: #{tpu_custom_call.1} parent=1 // pred_fallthru
      _
    %90 = vsyncpa [#allocation3], 1
    %91 = vsyncpa [#allocation4], 1

</llo_original>
